<compile_context>
chip_gen: v5e
topology: v5e:2x2
jax: 0.10.0
libtpu: 0.0.40
codegen_flags: <defaults>
</compile_context>

<pallas_src>
import math

import jax
import jax.numpy as jnp
from jax.experimental import pallas as pl
from jax.experimental.pallas import tpu as pltpu

D_MODEL = 128
DROPOUT_P = 0.1
MAX_LEN = 200


def make_positional_encoding(d_model: int = D_MODEL, max_len: int = MAX_LEN) -> jnp.ndarray:
    """Deterministic sinusoidal PE buffer, shape [max_len, d_model] (float32). __init__ glue."""
    position = jnp.arange(0, max_len, dtype=jnp.float32)[:, None]             # [max_len, 1]
    div_term = jnp.exp(jnp.arange(0, d_model, 2, dtype=jnp.float32)
                       * (-math.log(10000.0) / d_model))                       # [d_model/2]
    pe = jnp.zeros((max_len, d_model), dtype=jnp.float32)
    pe = pe.at[:, 0::2].set(jnp.sin(position * div_term))
    pe = pe.at[:, 1::2].set(jnp.cos(position * div_term))
    return pe


# ---------------------------------------------------------------------------
# Kernels: minimal VPU work, fused add (+ optional single multiply).
# ---------------------------------------------------------------------------
def _add_pe_kernel(x_ref, pe_ref, o_ref):
    # x_ref: (TB, S, D); pe_ref: (S, D) resident across the grid.
    o_ref[...] = (x_ref[...] + pe_ref[...][None, :, :]).astype(o_ref.dtype)


def _add_pe_dropout_kernel(x_ref, pe_ref, scale_ref, o_ref):
    # scale_ref holds keep_mask / (1 - p): one multiply instead of compare + select.
    o_ref[...] = ((x_ref[...] + pe_ref[...][None, :, :]) * scale_ref[...]).astype(o_ref.dtype)


# ---------------------------------------------------------------------------
# Wrapper
# ---------------------------------------------------------------------------
def _choose_batch_tile(B: int, S: int, D: int, itemsize: int,
                       target_bytes: int = 1 << 20,
                       min_split_bytes: int = 128 << 10) -> int:
    """Pick TB so each (TB, S, D) tile is ~1 MiB (well under scoped VMEM even with
    double-buffered x/mask/out on v7x's 64 MiB), but keep >=2 grid steps when the
    halves are still reasonably sized (second TensorCore on v7x)."""
    row_bytes = S * D * itemsize
    tb = max(1, min(B, target_bytes // max(row_bytes, 1)))
    if tb >= B and B > 1 and (B // 2) * row_bytes >= min_split_bytes:
        tb = pl.cdiv(B, 2)
    return int(tb)


def positional_encoding_forward(x: jnp.ndarray,
                                pe: jnp.ndarray,
                                *,
                                p: float = DROPOUT_P,
                                training: bool = False,
                                rng_key: jax.Array | None = None) -> jnp.ndarray:
    """x: [B, S, D]. Returns dropout(x + pe[:S]) (identity dropout if not training)."""
    B, S, D = x.shape
    assert D == pe.shape[1]
    assert S <= pe.shape[0]
    pe_slice = pe[:S, :]                                   # glue: static slice of the buffer

    tb = _choose_batch_tile(B, S, D, jnp.dtype(x.dtype).itemsize)
    grid = (pl.cdiv(B, tb),)

    x_spec = pl.BlockSpec((tb, S, D), lambda i: (i, 0, 0))   # contiguous TB*S*D slab per step
    pe_spec = pl.BlockSpec((S, D), lambda i: (0, 0))         # resident across the grid

    apply_dropout = bool(training) and p > 0.0
    if apply_dropout:
        if rng_key is None:
            rng_key = jax.random.PRNGKey(0)
        keep = jax.random.bernoulli(rng_key, 1.0 - p, (B, S, D))
        keep_scale = keep.astype(x.dtype) * (1.0 / (1.0 - p))   # inverted-dropout scale, fused in-kernel
        kernel = _add_pe_dropout_kernel
        in_specs = [x_spec, pe_spec, x_spec]
        args = (x, pe_slice, keep_scale)
    else:
        kernel = _add_pe_kernel
        in_specs = [x_spec, pe_spec]
        args = (x, pe_slice)

    return pl.pallas_call(
        kernel,
        out_shape=jax.ShapeDtypeStruct((B, S, D), x.dtype),
        grid=grid,
        in_specs=in_specs,
        out_specs=x_spec,
        compiler_params=pltpu.CompilerParams(dimension_semantics=("parallel",)),
    )(*args)


if __name__ == "__main__":
    key = jax.random.PRNGKey(0)
    xkey, dkey = jax.random.split(key)

    B, S, D = 2, 8, D_MODEL                 # batch=2, seq=8, hidden=128 (module's d_model)
    x = jax.random.normal(xkey, (B, S, D), dtype=jnp.float32)
    pe = make_positional_encoding(D, MAX_LEN)

    # Eval-mode forward (dropout is identity) — deterministic, checked against reference.
    out_eval = jax.block_until_ready(positional_encoding_forward(x, pe, training=False))
    ref = x + pe[None, :S, :]
    assert jnp.allclose(out_eval, ref, atol=1e-6), "eval-mode mismatch vs reference"

    # Training-mode forward (fused add + inverted-dropout multiply).
    out_train = jax.block_until_ready(
        positional_encoding_forward(x, pe, training=True, rng_key=dkey))
    assert out_train.shape == (B, S, D)
    scaled = ref * (1.0 / (1.0 - DROPOUT_P))
    ok = jnp.isclose(out_train, 0.0, atol=1e-6) | jnp.isclose(out_train, scaled, atol=1e-5)
    assert bool(jnp.all(ok)), "training-mode values are neither dropped nor correctly scaled"

    print("KERNEL_OK")
</pallas_src>

<mosaic_0001>
module attributes {stable_mosaic.version = 11 : i64} {
  func.func @_add_pe_kernel(%arg0: i32, %arg1: memref<2x8x128xf32, #tpu.memory_space<vmem>>, %arg2: memref<8x128xf32, #tpu.memory_space<vmem>>, %arg3: memref<2x8x128xf32, #tpu.memory_space<vmem>>) attributes {dimension_semantics = [#tpu.dimension_semantics<parallel>], iteration_bounds = array<i64: 1>, scalar_prefetch = 0 : i64, scratch_operands = 0 : i64, tpu.core_type = #tpu.core_type<tc>, window_params = [{transform_indices = @transform_0, window_bounds = array<i64: 2, 8, 128>}, {pipeline_mode = #tpu.pipeline_mode<synchronous>, transform_indices = @transform_1, window_bounds = array<i64: 8, 128>}, {transform_indices = @transform_2, window_bounds = array<i64: 2, 8, 128>}]} {
    %c0 = arith.constant 0 : index
    %c0_0 = arith.constant 0 : index
    %c0_1 = arith.constant 0 : index
    %0 = vector.load %arg1[%c0, %c0_0, %c0_1] : memref<2x8x128xf32, #tpu.memory_space<vmem>>, vector<2x8x128xf32>
    %c0_2 = arith.constant 0 : index
    %c0_3 = arith.constant 0 : index
    %1 = vector.load %arg2[%c0_2, %c0_3] : memref<8x128xf32, #tpu.memory_space<vmem>>, vector<8x128xf32>
    %2 = vector.shape_cast %1 : vector<8x128xf32> to vector<1x8x128xf32>
    %3 = vector.broadcast %2 : vector<1x8x128xf32> to vector<2x8x128xf32>
    %4 = arith.addf %0, %3 : vector<2x8x128xf32>
    %c0_4 = arith.constant 0 : index
    %c0_5 = arith.constant 0 : index
    %c0_6 = arith.constant 0 : index
    %5 = vector.load %arg3[%c0_4, %c0_5, %c0_6] : memref<2x8x128xf32, #tpu.memory_space<vmem>>, vector<2x8x128xf32>
    tpu.vector_store %arg3[%c0_4, %c0_5, %c0_6], %4 {strides = array<i32>} : memref<2x8x128xf32, #tpu.memory_space<vmem>>, vector<2x8x128xf32>,
    return
  }
  func.func @transform_0(%arg0: i32) -> (i32, i32, i32) {
    %c0_i32 = arith.constant 0 : i32
    %c0_i32_0 = arith.constant 0 : i32
    %c0_i32_1 = arith.constant 0 : i32
    return %arg0, %c0_i32, %c0_i32_0 : i32, i32, i32
  }
  func.func @transform_1(%arg0: i32) -> (i32, i32) {
    %c0_i32 = arith.constant 0 : i32
    %c0_i32_0 = arith.constant 0 : i32
    %c0_i32_1 = arith.constant 0 : i32
    return %c0_i32, %c0_i32_0 : i32, i32
  }
  func.func @transform_2(%arg0: i32) -> (i32, i32, i32) {
    %c0_i32 = arith.constant 0 : i32
    %c0_i32_0 = arith.constant 0 : i32
    %c0_i32_1 = arith.constant 0 : i32
    return %arg0, %c0_i32, %c0_i32_0 : i32, i32, i32
  }
}

</mosaic_0001>

<llo_original>
// kernel: tpu_custom_call.1
$region0: #{tpu_custom_call.1}
  #allocation0 [shape = 'u32[]', space=smem, size = 0x4, offset = 0x4, fixed_abs, tag = 'smem constant byte address 0x4 - core index']
  #allocation1 [shape = 'u32[72,128]{1,0:T(1,128)}', space=vmem, size = 0x9000, scoped, tag = 'internal scratch']
  %s0 = inlined_call_operand.hbm [shape: f32[2,8,128], index: 0, kind: input, shape index: {}]
  %s1 = inlined_call_operand.hbm [shape: f32[8,128], index: 1, kind: input, shape index: {}]
  %s2 = inlined_call_operand.hbm [shape: f32[2,8,128], index: 2, kind: output, shape index: {}]
  %s3 = sld [smem:[#allocation0]]
  $region26: #{tpu_custom_call.1} parent=0
    _
  %s5 = ssub.s32 1, %s3
  %s6 = scalar_select 0, %s5, %s3
  $region1: #{tpu_custom_call.1} parent=0
    #allocation2 [shape = 'u8[8192]{0}', space=vmem, size = 0x2000, scoped, tag = 'input window, operand 0, single buffered']
    #allocation3 [shape = 's32[1]{0}', space=sflag, size = 0x4, scoped, tag = 'scoped memory for tpu_custom_call.1']
    #allocation4 [shape = 's32[1]{0}', space=sflag, size = 0x4, scoped, tag = 'scoped memory for tpu_custom_call.1']
    #allocation5 [shape = 'u8[4096]{0}', space=vmem, size = 0x1000, scoped, tag = 'input window, operand 1, single buffered']
    #allocation6 [shape = 's32[1]{0}', space=sflag, size = 0x4, scoped, tag = 'scoped memory for tpu_custom_call.1']
    #allocation7 [shape = 'u8[8192]{0}', space=vmem, size = 0x2000, scoped, tag = 'output window, operand 0, single buffered']
    %7 = vsyncpa [#allocation3], 0
    %8 = vsyncpa [#allocation6], 0
    %9 = vsyncpa [#allocation4], 0
    // Predicated region
    $region2: #{tpu_custom_call.1} parent=1 // pred_check
      _
    $region3: #{tpu_custom_call.1} parent=1 // pred_check_branch
      %11 = sbr.rel (0) target = $region5
    $region4: #{tpu_custom_call.1} parent=1 // pred_region
      %13 = vsyncadd [#allocation3], 0
      %s14 = sshll.u32 %s0, 4
      %s15 = int_to_ptr.hbm [resolvable:$true] %s14
      %s16 = sshll.u32 [#allocation2], 4
      %s17 = int_to_ptr.vmem [resolvable:$true] %s16
      %22 = dma.hbm_to_vmem [thread:$0]  %s15, 256, %s17, [#allocation3], 128, 128, 8
    $region5: #{tpu_custom_call.1} parent=1 // pred_fallthru
      _
    // Predicated region
    $region6: #{tpu_custom_call.1} parent=1 // pred_check
      _
    $region7: #{tpu_custom_call.1} parent=1 // pred_check_branch
      %24 = sbr.rel (0) target = $region9
    $region8: #{tpu_custom_call.1} parent=1 // pred_region
      %26 = vsyncadd [#allocation6], 0
      %s28 = sshll.u32 %s1, 4
      %s29 = int_to_ptr.hbm [resolvable:$true] %s28
      %s30 = sshll.u32 [#allocation5], 4
      %s31 = int_to_ptr.vmem [resolvable:$true] %s30
      %33 = dma.hbm_to_vmem [thread:$0]  %s29, 128, %s31, [#allocation6]
    $region9: #{tpu_custom_call.1} parent=1 // pred_fallthru
      _
    // Predicated region
    $region10: #{tpu_custom_call.1} parent=1 // pred_check
      _
    $region11: #{tpu_custom_call.1} parent=1 // pred_check_branch
      %35 = sbr.rel (0) target = $region13
    $region12: #{tpu_custom_call.1} parent=1 // pred_region
      %37 = dma.done [#allocation3], 256
    $region13: #{tpu_custom_call.1} parent=1 // pred_fallthru
      _
    // Predicated region
    $region14: #{tpu_custom_call.1} parent=1 // pred_check
      _
    $region15: #{tpu_custom_call.1} parent=1 // pred_check_branch
      %39 = sbr.rel (0) target = $region17
    $region16: #{tpu_custom_call.1} parent=1 // pred_region
      %41 = dma.done [#allocation6], 128
    $region17: #{tpu_custom_call.1} parent=1 // pred_fallthru
      _
    %v42 = vld [vmem:[#allocation2] sm:$0xff]
    %v43 = vld [vmem:[#allocation2 + $0x8] sm:$0xff]
    %v44 = vld [vmem:[#allocation5] sm:$0xff]
    %v45 = vadd.f32 %v42, %v44
    %v46 = vadd.f32 %v43, %v44
    %47 = vst [vmem:[#allocation7] sm:$0xff] %v45
    %48 = vst [vmem:[#allocation7 + $0x8] sm:$0xff] %v46
    // Predicated region
    $region18: #{tpu_custom_call.1} parent=1 // pred_check
      _
    $region19: #{tpu_custom_call.1} parent=1 // pred_check_branch
      %50 = sbr.rel (0) target = $region21
    $region20: #{tpu_custom_call.1} parent=1 // pred_region
      %52 = vsyncadd [#allocation4], 0
      %s53 = sshll.u32 [#allocation7], 4
      %s54 = int_to_ptr.vmem [resolvable:$true] %s53
      %s55 = sshll.u32 %s2, 4
      %s56 = int_to_ptr.hbm [resolvable:$true] %s55
      %61 = dma.vmem_to_hbm [thread:$0]  %s54, 256, %s56, [#allocation4], 128, 128, 8
    $region21: #{tpu_custom_call.1} parent=1 // pred_fallthru
      _
    // Predicated region
    $region22: #{tpu_custom_call.1} parent=1 // pred_check
      _
    $region23: #{tpu_custom_call.1} parent=1 // pred_check_branch
      %63 = sbr.rel (0) target = $region25
    $region24: #{tpu_custom_call.1} parent=1 // pred_region
      %65 = dma.done [#allocation4], 256
    $region25: #{tpu_custom_call.1} parent=1 // pred_fallthru
      _
    %66 = vsyncpa [#allocation3], 1
    %67 = vsyncpa [#allocation6], 1
    %68 = vsyncpa [#allocation4], 1

</llo_original>
